<compile_context>
chip_gen: v7x
topology: tpu7x:2x2x1
jax: 0.10.0
libtpu: 0.0.40
codegen_flags: <defaults>
</compile_context>

<pallas_src>
import jax
import jax.numpy as jnp
from jax.experimental import pallas as pl
from jax.experimental.pallas import tpu as pltpu


def _agg_edge_concat_kernel(h_ref, w_ref, mask_ref, efeat_ref, invdiv_ref, o_ref):
    # h_ref:      (N, D)      f32   node features (shared across dst tiles)
    # w_ref:      (D+E, Z)    f32   linear.weight.T (bias=False)
    # mask_ref:   (TN, N)     bf16  adjacency tile, mask[j, i] = 1 iff edge i -> j
    # efeat_ref:  (TN, E, N)  f32   dense edge features, zero where no edge
    # invdiv_ref: (TN, 1)     f32   1 / degree-bucket-size (0 for isolated nodes)
    # o_ref:      (TN, Z)     f32
    d = h_ref.shape[1]

    # Node-feature half of the message sum: sum_i mask[j,i] * h_i  (MXU matmul).
    mask = mask_ref[...].astype(jnp.float32)
    s_node = jnp.dot(mask, h_ref[...], preferred_element_type=jnp.float32)     # (TN, D)

    # Edge-feature half: efeat is zero-filled off-edge, so a plain sum over the
    # lane-dense src axis is exactly the sum over incoming edges (no extra mask mul).
    s_edge = jnp.sum(efeat_ref[...], axis=-1)                                   # (TN, E)

    # accum = concat([s_node, s_edge]) / len(nodes); Linear (no bias) -> split W by rows.
    w = w_ref[...]
    pre = (jnp.dot(s_node, w[:d, :], preferred_element_type=jnp.float32)
           + jnp.dot(s_edge, w[d:, :], preferred_element_type=jnp.float32))     # (TN, Z)
    pre = pre * invdiv_ref[...]

    # ELU (alpha = 1); clamp exp argument so the untaken branch never overflows.
    o_ref[...] = jnp.where(pre > 0,
                           pre,
                           jnp.exp(jnp.minimum(pre, 0.0)) - 1.0).astype(o_ref.dtype)


def weighted_agg_edge_concat_forward(h, edge_feats, mask_dst_src, linear_weight,
                                     *, tile_n=None):
    """h: (N, D) f32; edge_feats: (N_dst, E, N_src) f32, zero where no edge;
       mask_dst_src: (N_dst, N_src) {0,1}; linear_weight: (Z, D+E) (torch layout).
       Returns (N, Z) f32 == module's 'z_concat_edges'."""
    N, D = h.shape
    E = edge_feats.shape[1]
    Z = linear_weight.shape[0]
    assert linear_weight.shape[1] == D + E
    assert edge_feats.shape == (N, E, N)
    assert mask_dst_src.shape == (N, N)

    # Destination-node tile.  Tune per generation (v7x: 256-512, v6e/v5e: larger);
    # for the toy shapes in __main__ a 16-row tile keeps bf16 sublane tiling happy.
    if tile_n is None:
        tile_n = min(N, 256)
    assert N % tile_n == 0, "tile_n must divide N"

    mask_f32 = mask_dst_src.astype(jnp.float32)
    # DGL degree bucketing: gnn_reduce divides by len(nodes) == number of nodes sharing
    # this node's in-degree.  Isolated nodes are never reduced in DGL; we output
    # elu(0) = 0 for them (inv_div = 0 keeps accum at 0).
    deg = jnp.sum(mask_f32, axis=1)                                             # (N,)
    bucket = jnp.sum((deg[:, None] == deg[None, :]).astype(jnp.float32), axis=1)
    inv_div = jnp.where(deg > 0, 1.0 / bucket, 0.0).reshape(N, 1).astype(jnp.float32)

    w_t = jnp.asarray(linear_weight, jnp.float32).T                             # (D+E, Z)
    mask_bf16 = mask_dst_src.astype(jnp.bfloat16)      # 0/1 exact in bf16

    return pl.pallas_call(
        _agg_edge_concat_kernel,
        out_shape=jax.ShapeDtypeStruct((N, Z), jnp.float32),
        grid_spec=pltpu.PrefetchScalarGridSpec(
            num_scalar_prefetch=0,
            grid=(N // tile_n,),
            in_specs=[
                pl.BlockSpec((N, D), lambda t: (0, 0)),              # h (shared)
                pl.BlockSpec((D + E, Z), lambda t: (0, 0)),          # W^T (shared)
                pl.BlockSpec((tile_n, N), lambda t: (t, 0)),         # mask tile
                pl.BlockSpec((tile_n, E, N), lambda t: (t, 0, 0)),   # edge-feature tile
                pl.BlockSpec((tile_n, 1), lambda t: (t, 0)),         # 1/len(nodes) tile
            ],
            out_specs=pl.BlockSpec((tile_n, Z), lambda t: (t, 0)),
        ),
        compiler_params=pltpu.CompilerParams(
            dimension_semantics=("parallel",),       # dst tiles independent -> megacore
            vmem_limit_bytes=32 * 1024 * 1024,
        ),
    )(h, w_t, mask_bf16, edge_feats, inv_div)


def _reference_jax(h, edge_feats, mask_dst_src, linear_weight):
    """Pure-JAX replica of the module's forward (incl. DGL degree-bucketing divisor)."""
    mask = mask_dst_src.astype(jnp.float32)
    deg = jnp.sum(mask, axis=1)
    bucket = jnp.sum((deg[:, None] == deg[None, :]).astype(jnp.float32), axis=1)
    inv_div = jnp.where(deg > 0, 1.0 / bucket, 0.0)
    s_node = mask @ h                                   # sum of src node feats over in-edges
    s_edge = jnp.sum(edge_feats, axis=-1)               # sum of edge label feats over in-edges
    accum = jnp.concatenate([s_node, s_edge], axis=1) * inv_div[:, None]
    pre = accum @ jnp.asarray(linear_weight, jnp.float32).T
    return jnp.where(pre > 0, pre, jnp.exp(jnp.minimum(pre, 0.0)) - 1.0)


if __name__ == "__main__":
    # Small shapes consistent with the module: node_dim=8, edge_ft_out_dim=8,
    # z_concat_edges_dim=16, 32 graph nodes.
    N, node_dim, edge_dim, z_dim = 32, 8, 8, 16
    tile_n = 16

    key = jax.random.PRNGKey(0)
    k_h, k_e, k_w, k_g = jax.random.split(key, 4)

    h = jax.random.normal(k_h, (N, node_dim), dtype=jnp.float32)

    # Random directed graph + self-loops (every node has >= 1 incoming edge, the usual
    # DGL usage for update_all).
    mask_dst_src = (jax.random.uniform(k_g, (N, N)) < 0.3).astype(jnp.float32)
    mask_dst_src = jnp.maximum(mask_dst_src, jnp.eye(N, dtype=jnp.float32))

    # Dense edge-label features laid out (dst, edge_dim, src), zero where no edge.
    edge_feats = (jax.random.normal(k_e, (N, edge_dim, N), dtype=jnp.float32)
                  * mask_dst_src[:, None, :])

    # nn.Linear(node_dim + edge_dim, z_dim, bias=False) weight, torch layout (out, in).
    linear_weight = jax.random.normal(k_w, (z_dim, node_dim + edge_dim),
                                      dtype=jnp.float32) * 0.2

    out = weighted_agg_edge_concat_forward(h, edge_feats, mask_dst_src, linear_weight,
                                           tile_n=tile_n)
    out = jax.block_until_ready(out)

    ref = _reference_jax(h, edge_feats, mask_dst_src, linear_weight)
    assert out.shape == (N, z_dim), out.shape
    max_err = float(jnp.max(jnp.abs(out - ref)))
    assert jnp.allclose(out, ref, atol=1e-4, rtol=1e-4), max_err

    print("KERNEL_OK")
</pallas_src>

<mosaic_0001>
module attributes {stable_mosaic.version = 11 : i64} {
  func.func @_agg_edge_concat_kernel(%arg0: i32, %arg1: memref<32x8xf32, #tpu.memory_space<vmem>>, %arg2: memref<16x16xf32, #tpu.memory_space<vmem>>, %arg3: memref<16x32xbf16, #tpu.memory_space<vmem>>, %arg4: memref<16x8x32xf32, #tpu.memory_space<vmem>>, %arg5: memref<16x1xf32, #tpu.memory_space<vmem>>, %arg6: memref<16x16xf32, #tpu.memory_space<vmem>>) attributes {dimension_semantics = [#tpu.dimension_semantics<parallel>], iteration_bounds = array<i64: 2>, scalar_prefetch = 0 : i64, scratch_operands = 0 : i64, tpu.core_type = #tpu.core_type<tc>, window_params = [{pipeline_mode = #tpu.pipeline_mode<synchronous>, transform_indices = @transform_0, window_bounds = array<i64: 32, 8>}, {pipeline_mode = #tpu.pipeline_mode<synchronous>, transform_indices = @transform_1, window_bounds = array<i64: 16, 16>}, {transform_indices = @transform_2, window_bounds = array<i64: 16, 32>}, {transform_indices = @transform_3, window_bounds = array<i64: 16, 8, 32>}, {transform_indices = @transform_4, window_bounds = array<i64: 16, 1>}, {transform_indices = @transform_5, window_bounds = array<i64: 16, 16>}]} {
    %c0 = arith.constant 0 : index
    %c0_0 = arith.constant 0 : index
    %0 = vector.load %arg3[%c0, %c0_0] : memref<16x32xbf16, #tpu.memory_space<vmem>>, vector<16x32xbf16>
    %1 = arith.extf %0 : vector<16x32xbf16> to vector<16x32xf32>
    %c0_1 = arith.constant 0 : index
    %c0_2 = arith.constant 0 : index
    %2 = vector.load %arg1[%c0_1, %c0_2] : memref<32x8xf32, #tpu.memory_space<vmem>>, vector<32x8xf32>
    %cst = arith.constant dense<0.000000e+00> : vector<16x8xf32>
    %3 = tpu.matmul %1, %2, %cst {dimension_numbers = #tpu.dot_dimension_numbers<[1], [0], [0], [1], [0, 0, 1, 1], [], []>} : vector<16x32xf32>, vector<32x8xf32>, vector<16x8xf32> -> vector<16x8xf32>
    %c0_3 = arith.constant 0 : index
    %c0_4 = arith.constant 0 : index
    %c0_5 = arith.constant 0 : index
    %4 = vector.load %arg4[%c0_3, %c0_4, %c0_5] : memref<16x8x32xf32, #tpu.memory_space<vmem>>, vector<16x8x32xf32>
    %cst_6 = arith.constant dense<0.000000e+00> : vector<16x8xf32>
    %5 = vector.multi_reduction <add>, %4, %cst_6 [2] : vector<16x8x32xf32> to vector<16x8xf32>
    %c0_7 = arith.constant 0 : index
    %c0_8 = arith.constant 0 : index
    %6 = vector.load %arg2[%c0_7, %c0_8] : memref<16x16xf32, #tpu.memory_space<vmem>>, vector<16x16xf32>
    %7 = vector.extract_strided_slice %6 {offsets = [0, 0], sizes = [8, 16], strides = [1, 1]} : vector<16x16xf32> to vector<8x16xf32>
    %cst_9 = arith.constant dense<0.000000e+00> : vector<16x16xf32>
    %8 = tpu.matmul %3, %7, %cst_9 {dimension_numbers = #tpu.dot_dimension_numbers<[1], [0], [0], [1], [0, 0, 1, 1], [], []>} : vector<16x8xf32>, vector<8x16xf32>, vector<16x16xf32> -> vector<16x16xf32>
    %9 = vector.extract_strided_slice %6 {offsets = [8, 0], sizes = [8, 16], strides = [1, 1]} : vector<16x16xf32> to vector<8x16xf32>
    %cst_10 = arith.constant dense<0.000000e+00> : vector<16x16xf32>
    %10 = tpu.matmul %5, %9, %cst_10 {dimension_numbers = #tpu.dot_dimension_numbers<[1], [0], [0], [1], [0, 0, 1, 1], [], []>} : vector<16x8xf32>, vector<8x16xf32>, vector<16x16xf32> -> vector<16x16xf32>
    %11 = arith.addf %8, %10 : vector<16x16xf32>
    %c0_11 = arith.constant 0 : index
    %c0_12 = arith.constant 0 : index
    %12 = vector.load %arg5[%c0_11, %c0_12] : memref<16x1xf32, #tpu.memory_space<vmem>>, vector<16x1xf32>
    %13 = vector.broadcast %12 : vector<16x1xf32> to vector<16x16xf32>
    %14 = arith.mulf %11, %13 : vector<16x16xf32>
    %cst_13 = arith.constant 0.000000e+00 : f32
    %15 = vector.broadcast %cst_13 : f32 to vector<16x16xf32>
    %16 = arith.cmpf ogt, %14, %15 : vector<16x16xf32>
    %cst_14 = arith.constant 0.000000e+00 : f32
    %17 = vector.broadcast %cst_14 : f32 to vector<16x16xf32>
    %18 = arith.minimumf %14, %17 : vector<16x16xf32>
    %19 = math.exp %18 : vector<16x16xf32>
    %cst_15 = arith.constant 1.000000e+00 : f32
    %20 = vector.broadcast %cst_15 : f32 to vector<16x16xf32>
    %21 = arith.subf %19, %20 : vector<16x16xf32>
    %22 = arith.select %16, %14, %21 : vector<16x16xi1>, vector<16x16xf32>
    %c0_16 = arith.constant 0 : index
    %c0_17 = arith.constant 0 : index
    %23 = vector.load %arg6[%c0_16, %c0_17] : memref<16x16xf32, #tpu.memory_space<vmem>>, vector<16x16xf32>
    tpu.vector_store %arg6[%c0_16, %c0_17], %22 {strides = array<i32>} : memref<16x16xf32, #tpu.memory_space<vmem>>, vector<16x16xf32>,
    return
  }
  func.func @transform_0(%arg0: i32) -> (i32, i32) {
    %c0_i32 = arith.constant 0 : i32
    %c0_i32_0 = arith.constant 0 : i32
    %c0_i32_1 = arith.constant 0 : i32
    return %c0_i32, %c0_i32_0 : i32, i32
  }
  func.func @transform_1(%arg0: i32) -> (i32, i32) {
    %c0_i32 = arith.constant 0 : i32
    %c0_i32_0 = arith.constant 0 : i32
    %c0_i32_1 = arith.constant 0 : i32
    return %c0_i32, %c0_i32_0 : i32, i32
  }
  func.func @transform_2(%arg0: i32) -> (i32, i32) {
    %c0_i32 = arith.constant 0 : i32
    %c0_i32_0 = arith.constant 0 : i32
    return %arg0, %c0_i32 : i32, i32
  }
  func.func @transform_3(%arg0: i32) -> (i32, i32, i32) {
    %c0_i32 = arith.constant 0 : i32
    %c0_i32_0 = arith.constant 0 : i32
    %c0_i32_1 = arith.constant 0 : i32
    return %arg0, %c0_i32, %c0_i32_0 : i32, i32, i32
  }
  func.func @transform_4(%arg0: i32) -> (i32, i32) {
    %c0_i32 = arith.constant 0 : i32
    %c0_i32_0 = arith.constant 0 : i32
    return %arg0, %c0_i32 : i32, i32
  }
  func.func @transform_5(%arg0: i32) -> (i32, i32) {
    %c0_i32 = arith.constant 0 : i32
    %c0_i32_0 = arith.constant 0 : i32
    return %arg0, %c0_i32 : i32, i32
  }
}

</mosaic_0001>

<llo_original>
// kernel: tpu_custom_call.1
$region0: #{tpu_custom_call.1}
  #allocation0 [shape = 'u32[]', space=smem, size = 0x4, offset = 0x4, fixed_abs, tag = 'smem constant byte address 0x4 - core index']
  #allocation1 [shape = 'u32[144,128]{1,0:T(1,128)}', space=vmem, size = 0x12000, scoped, tag = 'internal scratch']
  %s0 = inlined_call_operand.vmem [shape: f32[32,8], index: 0, kind: input, shape index: {}]
  %s1 = inlined_call_operand.vmem [shape: f32[16,16], index: 1, kind: input, shape index: {}]
  %s2 = inlined_call_operand.vmem [shape: bf16[32,32], index: 2, kind: input, shape index: {}]
  %s3 = inlined_call_operand.hbm [shape: f32[32,8,32], index: 3, kind: input, shape index: {}]
  %s4 = inlined_call_operand.vmem [shape: f32[32,1], index: 4, kind: input, shape index: {}]
  %s5 = inlined_call_operand.vmem [shape: f32[32,16], index: 5, kind: output, shape index: {}]
  %s6 = sld [smem:[#allocation0]]
  $region57: #{tpu_custom_call.1} parent=0
    _
  %s8 = ssub.s32 1, %s6
  %s9 = scalar_select 0, %s8, %s6
  $region1: #{tpu_custom_call.1} parent=0
    #allocation2 [shape = 'u8[131072]{0}', space=vmem, size = 0x20000, scoped, tag = 'input window, operand 3']
    #allocation3 [shape = 's32[2]{0}', space=sflag, size = 0x8, scoped, tag = 'scoped memory for tpu_custom_call.1']
    %10 = vsyncpa [#allocation3], 0
    %s11 = scalar_lea.sflag [#allocation3], 1
    %12 = vsyncpa %s11, 0
    loop: start=0, step=1, limit=4
    $region2: #{tpu_custom_call.1} parent=1 // loop_pre_header
      _
    $region3: #{tpu_custom_call.1} parent=1 // loop_header
      %s14 = sphi 0, %s18
      %p15 = scmp.ge.s32.totalorder %s14, 4
      %s22 = sphi 0, %s22
      %s24 = sphi 0, %s22
      %s25 = sphi 0, %s24
      %s39 = sphi 0, %s25
      %s43 = sphi 0, %s43
      %s45 = sphi 0, %s43
      %s46 = sphi 0, %s45
      %s60 = sphi 0, %s46
      %s66 = sphi 0, %s68
      %s69 = sphi 0, %s66
      %s70 = sphi 0, %s69
      %s86 = sphi 0, %s70
      %s92 = sphi 0, %s94
      %s95 = sphi 0, %s92
      %s96 = sphi 0, %s95
      %s112 = sphi 0, %s96
      %s118 = sphi 0, %s120
      %s121 = sphi 0, %s118
      %s122 = sphi 0, %s121
      %s138 = sphi 0, %s122
      %s144 = sphi 0, %s146
      %s147 = sphi 0, %s144
      %s148 = sphi 0, %s147
      %s164 = sphi 0, %s148
    $region4: #{tpu_custom_call.1} parent=1 // loop_header_branch
      %17 = sbr.rel (%p15) target = $region8
    $region5: #{tpu_custom_call.1} parent=1 // loop_body
      %s19 = ssub.s32 %s14, 1
      %s20 = ssub.s32 %s14, 2
      %s21 = sadd.s32 %s14, 1
      %s23 = sadd.s32 %s22, 1
      %p26 = scmp.eq.s32.totalorder %s14, 1
      %p27 = scmp.ne.s32.totalorder %s22, %s24
      %p28 = scmp.eq.s32.totalorder %s14, 0
      %p29 = por %p27, %p28
      %p30 = scmp.ne.s32.totalorder %s22, %s24
      %p31 = scmp.eq.s32.totalorder %s19, 1
      %p32 = por %p30, %p31
      %p33 = scmp.ne.s32.totalorder %s24, %s25
      %p34 = scmp.eq.s32.totalorder %s19, 0
      %p35 = por %p33, %p34
      %p36 = scmp.ne.s32.totalorder %s24, %s25
      %p37 = scmp.eq.s32.totalorder %s20, 1
      %p38 = por %p36, %p37
      %p40 = scmp.ne.s32.totalorder %s25, %s39
      %p41 = scmp.eq.s32.totalorder %s20, 0
      %p42 = por %p40, %p41
      %s44 = sadd.s32 %s43, 1
      %p47 = scmp.eq.s32.totalorder %s14, 1
      %p48 = scmp.ne.s32.totalorder %s43, %s45
      %p49 = scmp.eq.s32.totalorder %s14, 0
      %p50 = por %p48, %p49
      %p51 = scmp.ne.s32.totalorder %s43, %s45
      %p52 = scmp.eq.s32.totalorder %s19, 1
      %p53 = por %p51, %p52
      %p54 = scmp.ne.s32.totalorder %s45, %s46
      %p55 = scmp.eq.s32.totalorder %s19, 0
      %p56 = por %p54, %p55
      %p57 = scmp.ne.s32.totalorder %s45, %s46
      %p58 = scmp.eq.s32.totalorder %s20, 1
      %p59 = por %p57, %p58
      %p61 = scmp.ne.s32.totalorder %s46, %s60
      %p62 = scmp.eq.s32.totalorder %s20, 0
      %p63 = por %p61, %p62
      %s64 = ssub.s32 %s14, %s21
      %p65 = scmp.eq.s32.totalorder %s64, 0
      %s67 = sadd.s32 %s66, 1
      %s68 = scalar_select %p65, %s66, %s67
      %p71 = pneg %p65
      %p72 = scmp.eq.s32.totalorder %s14, 1
      %p73 = por %p71, %p72
      %p74 = scmp.ne.s32.totalorder %s66, %s69
      %p75 = scmp.eq.s32.totalorder %s14, 0
      %p76 = por %p74, %p75
      %p77 = scmp.ne.s32.totalorder %s66, %s69
      %p78 = scmp.eq.s32.totalorder %s19, 1
      %p79 = por %p77, %p78
      %p80 = scmp.ne.s32.totalorder %s69, %s70
      %p81 = scmp.eq.s32.totalorder %s19, 0
      %p82 = por %p80, %p81
      %p83 = scmp.ne.s32.totalorder %s69, %s70
      %p84 = scmp.eq.s32.totalorder %s20, 1
      %p85 = por %p83, %p84
      %p87 = scmp.ne.s32.totalorder %s70, %s86
      %p88 = scmp.eq.s32.totalorder %s20, 0
      %p89 = por %p87, %p88
      %s90 = ssub.s32 %s14, %s21
      %p91 = scmp.eq.s32.totalorder %s90, 0
      %s93 = sadd.s32 %s92, 1
      %s94 = scalar_select %p91, %s92, %s93
      %p97 = pneg %p91
      %p98 = scmp.eq.s32.totalorder %s14, 1
      %p99 = por %p97, %p98
      %p100 = scmp.ne.s32.totalorder %s92, %s95
      %p101 = scmp.eq.s32.totalorder %s14, 0
      %p102 = por %p100, %p101
      %p103 = scmp.ne.s32.totalorder %s92, %s95
      %p104 = scmp.eq.s32.totalorder %s19, 1
      %p105 = por %p103, %p104
      %p106 = scmp.ne.s32.totalorder %s95, %s96
      %p107 = scmp.eq.s32.totalorder %s19, 0
      %p108 = por %p106, %p107
      %p109 = scmp.ne.s32.totalorder %s95, %s96
      %p110 = scmp.eq.s32.totalorder %s20, 1
      %p111 = por %p109, %p110
      %p113 = scmp.ne.s32.totalorder %s96, %s112
      %p114 = scmp.eq.s32.totalorder %s20, 0
      %p115 = por %p113, %p114
      %s116 = ssub.s32 %s14, %s21
      %p117 = scmp.eq.s32.totalorder %s116, 0
      %s119 = sadd.s32 %s118, 1
      %s120 = scalar_select %p117, %s118, %s119
      %p123 = pneg %p117
      %p124 = scmp.eq.s32.totalorder %s14, 1
      %p125 = por %p123, %p124
      %p126 = scmp.ne.s32.totalorder %s118, %s121
      %p127 = scmp.eq.s32.totalorder %s14, 0
      %p128 = por %p126, %p127
      %p129 = scmp.ne.s32.totalorder %s118, %s121
      %p130 = scmp.eq.s32.totalorder %s19, 1
      %p131 = por %p129, %p130
      %p132 = scmp.ne.s32.totalorder %s121, %s122
      %p133 = scmp.eq.s32.totalorder %s19, 0
      %p134 = por %p132, %p133
      %p135 = scmp.ne.s32.totalorder %s121, %s122
      %p136 = scmp.eq.s32.totalorder %s20, 1
      %p137 = por %p135, %p136
      %p139 = scmp.ne.s32.totalorder %s122, %s138
      %p140 = scmp.eq.s32.totalorder %s20, 0
      %p141 = por %p139, %p140
      %s142 = ssub.s32 %s14, %s21
      %p143 = scmp.eq.s32.totalorder %s142, 0
      %s145 = sadd.s32 %s144, 1
      %s146 = scalar_select %p143, %s144, %s145
      %p149 = pneg %p143
      %p150 = scmp.eq.s32.totalorder %s14, 1
      %p151 = por %p149, %p150
      %p152 = scmp.ne.s32.totalorder %s144, %s147
      %p153 = scmp.eq.s32.totalorder %s14, 0
      %p154 = por %p152, %p153
      %p155 = scmp.ne.s32.totalorder %s144, %s147
      %p156 = scmp.eq.s32.totalorder %s19, 1
      %p157 = por %p155, %p156
      %p158 = scmp.ne.s32.totalorder %s147, %s148
      %p159 = scmp.eq.s32.totalorder %s19, 0
      %p160 = por %p158, %p159
      %p161 = scmp.ne.s32.totalorder %s147, %s148
      %p162 = scmp.eq.s32.totalorder %s20, 1
      %p163 = por %p161, %p162
      %p165 = scmp.ne.s32.totalorder %s148, %s164
      %p166 = scmp.eq.s32.totalorder %s20, 0
      %p167 = por %p165, %p166
      %p168 = scmp.le.s32.totalorder 1, %s14
      %p169 = scmp.lt.s32.totalorder %s14, 3
      %p170 = pnand %p168, %p169
      %p171 = pneg %p170
      // Predicated region
      $region9: #{tpu_custom_call.1} parent=5 // pred_check
        _
      $region10: #{tpu_custom_call.1} parent=5 // pred_check_branch
        %173 = sbr.rel (%p170) target = $region12
      $region11: #{tpu_custom_call.1} parent=5 // pred_region
        %s174 = ssub.s32 %s14, 1
        // Predicated region
        $region13: #{tpu_custom_call.1} parent=11 // pred_check
          %p175 = pneg %p35
        $region14: #{tpu_custom_call.1} parent=11 // pred_check_branch
          %177 = sbr.rel (%p175) target = $region16
        $region15: #{tpu_custom_call.1} parent=11 // pred_region
          _
        $region16: #{tpu_custom_call.1} parent=11 // pred_fallthru
          _
        // Predicated region
        $region17: #{tpu_custom_call.1} parent=11 // pred_check
          %p178 = pneg %p56
        $region18: #{tpu_custom_call.1} parent=11 // pred_check_branch
          %180 = sbr.rel (%p178) target = $region20
        $region19: #{tpu_custom_call.1} parent=11 // pred_region
          _
        $region20: #{tpu_custom_call.1} parent=11 // pred_fallthru
          _
      $region12: #{tpu_custom_call.1} parent=5 // pred_fallthru
        _
      %p181 = scmp.lt.s32.totalorder %s14, 2
      // Predicated region
      $region21: #{tpu_custom_call.1} parent=5 // pred_check
        %p182 = pneg %p181
      $region22: #{tpu_custom_call.1} parent=5 // pred_check_branch
        %184 = sbr.rel (%p182) target = $region24
      $region23: #{tpu_custom_call.1} parent=5 // pred_region
        // Predicated region
        $region25: #{tpu_custom_call.1} parent=23 // pred_check
          %p185 = pneg %p76
        $region26: #{tpu_custom_call.1} parent=23 // pred_check_branch
          %187 = sbr.rel (%p185) target = $region28
        $region27: #{tpu_custom_call.1} parent=23 // pred_region
          %s188 = smul.u32 2, %s14
          %p189 = scmp.lt.s32.totalorder %s188, 3
          %s190 = scalar_select %p189, %s188, 3
          %s191 = smul.addr %s190, 4
          %s192 = scalar_lea.vmem %s2, %s191
          %s193 = smul.u32 2, %s14
        $region28: #{tpu_custom_call.1} parent=23 // pred_fallthru
          _
        // Predicated region
        $region29: #{tpu_custom_call.1} parent=23 // pred_check
          %p194 = pneg %p102
        $region30: #{tpu_custom_call.1} parent=23 // pred_check_branch
          %196 = sbr.rel (%p194) target = $region32
        $region31: #{tpu_custom_call.1} parent=23 // pred_region
          %s197 = sand.u32 %s92, 1
          %s198 = scalar_lea.sflag [#allocation3], %s197
          %s199 = sand.u32 %s92, 1
          %s200 = smul.addr %s199, 128
          %s201 = scalar_lea.vmem [#allocation2], %s200
          %s202 = smul.u32 16, %s14
          %s204 = ssub.s32 2048, 2048
          %205 = vsyncadd %s198, %s204
          %s206 = smul.addr %s202, 128
          %s207 = scalar_lea.hbm %s3, %s206
          %s208 = sshll.u32 %s201, 4
          %s209 = int_to_ptr.vmem [resolvable:$true] %s208
          %214 = dma.hbm_to_vmem [thread:$0]  %s207, 2048, %s209, %s198, 128, 128, 8
        $region32: #{tpu_custom_call.1} parent=23 // pred_fallthru
          _
        // Predicated region
        $region33: #{tpu_custom_call.1} parent=23 // pred_check
          %p215 = pneg %p128
        $region34: #{tpu_custom_call.1} parent=23 // pred_check_branch
          %217 = sbr.rel (%p215) target = $region36
        $region35: #{tpu_custom_call.1} parent=23 // pred_region
          %s218 = smul.u32 2, %s14
          %p219 = scmp.lt.s32.totalorder %s218, 3
          %s220 = scalar_select %p219, %s218, 3
          %s221 = smul.addr %s220, 8
          %s222 = scalar_lea.vmem %s4, %s221
          %s223 = smul.u32 2, %s14
        $region36: #{tpu_custom_call.1} parent=23 // pred_fallthru
          _
      $region24: #{tpu_custom_call.1} parent=5 // pred_fallthru
        _
      %p224 = scmp.le.s32.totalorder 1, %s14
      %p225 = scmp.lt.s32.totalorder %s14, 3
      %p226 = pnand %p224, %p225
      %p227 = pneg %p226
      // Predicated region
      $region37: #{tpu_custom_call.1} parent=5 // pred_check
        _
      $region38: #{tpu_custom_call.1} parent=5 // pred_check_branch
        %229 = sbr.rel (%p226) target = $region40
      $region39: #{tpu_custom_call.1} parent=5 // pred_region
        %s230 = ssub.s32 %s14, 1
        %s231 = sand.u32 %s95, 1
        %s232 = scalar_lea.sflag [#allocation3], %s231
        %s233 = sand.u32 %s95, 1
        %s234 = smul.addr %s233, 128
        %s235 = scalar_lea.vmem [#allocation2], %s234
        // Predicated region
        $region41: #{tpu_custom_call.1} parent=39 // pred_check
          %p236 = pneg %p108
        $region42: #{tpu_custom_call.1} parent=39 // pred_check_branch
          %238 = sbr.rel (%p236) target = $region44
        $region43: #{tpu_custom_call.1} parent=39 // pred_region
          %239 = dma.done %s232, 2048
        $region44: #{tpu_custom_call.1} parent=39 // pred_fallthru
          _
        %p240 = pneg %p35
        %p241 = pneg %p32
        %p242 = pneg %p56
        %p243 = pneg %p53
        %s244 = smul.u32 2, %s19
        %p245 = scmp.lt.s32.totalorder %s244, 3
        %s246 = scalar_select %p245, %s244, 3
        %s247 = smul.addr %s246, 4
        %s248 = scalar_lea.vmem %s2, %s247
        %p249 = pneg %p82
        %p250 = pneg %p79
        %s251 = sand.u32 %s95, 1
        %s252 = scalar_lea.sflag [#allocation3], %s251
        %s253 = sand.u32 %s95, 1
        %s254 = smul.addr %s253, 128
        %s255 = scalar_lea.vmem [#allocation2], %s254
        %p256 = pneg %p108
        %p257 = pneg %p105
        %s258 = smul.u32 2, %s19
        %p259 = scmp.lt.s32.totalorder %s258, 3
        %s260 = scalar_select %p259, %s258, 3
        %s261 = smul.addr %s260, 8
        %s262 = scalar_lea.vmem %s4, %s261
        %p263 = pneg %p134
        %p264 = pneg %p131
        %p265 = pneg %p160
        %p266 = pneg %p157
        %s267 = smul.u32 2, %s19
        %p268 = scmp.lt.s32.totalorder %s267, 3
        %s269 = scalar_select %p268, %s267, 3
        %s270 = smul.addr %s269, 8
        %s271 = scalar_lea.vmem %s5, %s270
        %s272 = smul.u32 2, %s19
        %p273 = scmp.lt.s32.totalorder %s272, 3
        %s274 = scalar_select %p273, %s272, 3
        %s275 = smul.addr %s274, 4
        %s276 = scalar_lea.vmem %s2, %s275
        %s277 = smul.u32 2, %s19
        %s278 = smul.u32 16, %s19
        %s279 = smul.u32 2, %s19
        %p280 = scmp.lt.s32.totalorder %s279, 3
        %s281 = scalar_select %p280, %s279, 3
        %s282 = smul.addr %s281, 8
        %s283 = scalar_lea.vmem %s4, %s282
        %s284 = smul.u32 2, %s19
        %s285 = smul.u32 2, %s19
        %p286 = scmp.lt.s32.totalorder %s285, 3
        %s287 = scalar_select %p286, %s285, 3
        %s288 = smul.addr %s287, 8
        %s289 = scalar_lea.vmem %s5, %s288
        %s290 = smul.u32 2, %s19
        %v291 = vld [vmem:[%s276] sm:$0xf]
        %v292 = vld [vmem:[%s276 + $0x4] sm:$0xf]
        %v293 = vunpack.c.l.bf16 %v291
        %v294 = vunpack.c.l.bf16 %v292
        %v295 = vld [vmem:[%s0] sm:$0xff]
        %v296 = vld [vmem:[%s0 + $0x8] sm:$0xff]
        %v297 = vld [vmem:[%s0 + $0x10] sm:$0xff]
        %v298 = vld [vmem:[%s0 + $0x18] sm:$0xff]
        %vm299 = vcmask 261120
        %v301 = vsel %vm299, %v293, 0
        %v304 = vsel %vm299, %v294, 0
        %306 = vmatprep.subr.mxu0 0.0
        %307 = vmatpush1.msra.mxu0 %v295
        %308 = vmatprep.subr.mxu0 0.0
        %309 = vmatpush1.msra.mxu0 %v296
        %310 = vmatprep.subr.mxu0 0.0
        %311 = vmatpush1.msra.mxu0 %v297
        %312 = vmatprep.subr.mxu0 0.0
        %313 = vmatpush1.msra.mxu0 %v298
        %314 = vmatprep.subr.mxu0 0.0
        %315 = vmatpush1.msra.mxu0 0.0
        %316 = vmatprep.subr.mxu0 0.0
        %317 = vmatpush1.msra.mxu0 0.0
        %318 = vmatprep.subr.mxu0 0.0
        %319 = vmatpush1.msra.mxu0 0.0
        %320 = vmatprep.subr.mxu0 0.0
        %321 = vmatpush1.msra.mxu0 0.0
        %322 = vmatprep.subr.mxu0 0.0
        %323 = vmatpush1.msra.mxu0 0.0
        %324 = vmatprep.subr.mxu0 0.0
        %325 = vmatpush1.msra.mxu0 0.0
        %326 = vmatprep.subr.mxu0 0.0
        %327 = vmatpush1.msra.mxu0 0.0
        %328 = vmatprep.subr.mxu0 0.0
        %329 = vmatpush1.msra.mxu0 0.0
        %330 = vmatprep.subr.mxu0 0.0
        %331 = vmatpush1.msra.mxu0 0.0
        %332 = vmatprep.subr.mxu0 0.0
        %333 = vmatpush1.msra.mxu0 0.0
        %334 = vmatprep.subr.mxu0 0.0
        %335 = vmatpush1.msra.mxu0 0.0
        %336 = vmatprep.subr.mxu0 0.0
        %337 = vmatpush1.msra.mxu0 0.0
        %338 = vmatprep.subr.mxu0 0.0
        %339 = vmatpush1.msra.mxu0 0.0
        %340 = vmatprep.subr.mxu0 0.0
        %341 = vmatpush1.msra.mxu0 0.0
        %342 = vmatprep.subr.mxu0 0.0
        %343 = vmatpush1.msra.mxu0 0.0
        %344 = vmatprep.subr.mxu0 0.0
        %345 = vmatpush1.msra.mxu0 0.0
        %346 = vmatprep.subr.mxu0 0.0
        %347 = vmatpush1.msra.mxu0 0.0
        %348 = vmatprep.subr.mxu0 0.0
        %349 = vmatpush1.msra.mxu0 0.0
        %350 = vmatprep.subr.mxu0 0.0
        %351 = vmatpush1.msra.mxu0 0.0
        %352 = vmatprep.subr.mxu0 0.0
        %353 = vmatpush1.msra.mxu0 0.0
        %354 = vmatprep.subr.mxu0 0.0
        %355 = vmatpush1.msra.mxu0 0.0
        %356 = vmatprep.subr.mxu0 0.0
        %357 = vmatpush1.msra.mxu0 0.0
        %358 = vmatprep.subr.mxu0 0.0
        %359 = vmatpush1.msra.mxu0 0.0
        %360 = vmatprep.subr.mxu0 0.0
        %361 = vmatpush1.msra.mxu0 0.0
        %362 = vmatprep.subr.mxu0 0.0
        %363 = vmatpush1.msra.mxu0 0.0
        %364 = vmatprep.subr.mxu0 0.0
        %365 = vmatpush1.msra.mxu0 0.0
        %366 = vmatprep.subr.mxu0 0.0
        %367 = vmatpush1.msra.mxu0 0.0
        %368 = vmatprep.subr.mxu0 0.0
        %369 = vmatpush1.msra.mxu0 0.0
        %370 = vmatprep.mubr.f32.mxu0 0.0
        %371 = vmatmul.mubr.f32.gmra.mrb[0].mxu0 %v301
        %v372 = vpop.f32.mrb[0].mxu0
        %v373 = vadd.f32 0.0, %v372
        %v374 = vpop.f32.mrb[0].mxu0
        %375 = vmatprep.mubr.f32.mxu0 0.0
        %376 = vmatmul.mubr.f32.gmra.mrb[0].mxu0 %v304
        %v377 = vpop.f32.mrb[0].mxu0
        %v378 = vadd.f32 0.0, %v377
        %v379 = vpop.f32.mrb[0].mxu0
        %380 = vdwg.mxu0
        %v381 = vld [vmem:[%s235] sm:$0xff]
        %v382 = vld [vmem:[%s235 + $0x8] sm:$0xff]
        %v383 = vld [vmem:[%s235 + $0x10] sm:$0xff]
        %v384 = vld [vmem:[%s235 + $0x18] sm:$0xff]
        %v385 = vld [vmem:[%s235 + $0x20] sm:$0xff]
        %v386 = vld [vmem:[%s235 + $0x28] sm:$0xff]
        %v387 = vld [vmem:[%s235 + $0x30] sm:$0xff]
        %v388 = vld [vmem:[%s235 + $0x38] sm:$0xff]
        %v389 = vld [vmem:[%s235 + $0x40] sm:$0xff]
        %v390 = vld [vmem:[%s235 + $0x48] sm:$0xff]
        %v391 = vld [vmem:[%s235 + $0x50] sm:$0xff]
        %v392 = vld [vmem:[%s235 + $0x58] sm:$0xff]
        %v393 = vld [vmem:[%s235 + $0x60] sm:$0xff]
        %v394 = vld [vmem:[%s235 + $0x68] sm:$0xff]
        %v395 = vld [vmem:[%s235 + $0x70] sm:$0xff]
        %v396 = vld [vmem:[%s235 + $0x78] sm:$0xff]
        %v397 = vsel %vm299, %v381, 0.0
        %398 = vadd.xlane.f32.xlu0 %v397
        %v399 = vpop.xlane.xlu0 %398
        %v400 = vsel %vm299, %v382, 0.0
        %401 = vadd.xlane.f32.xlu0 %v400
        %v402 = vpop.xlane.xlu0 %401
        %v403 = vsel %vm299, %v383, 0.0
        %404 = vadd.xlane.f32.xlu0 %v403
        %v405 = vpop.xlane.xlu0 %404
        %v406 = vsel %vm299, %v384, 0.0
        %407 = vadd.xlane.f32.xlu0 %v406
        %v408 = vpop.xlane.xlu0 %407
        %v409 = vsel %vm299, %v385, 0.0
        %410 = vadd.xlane.f32.xlu0 %v409
        %v411 = vpop.xlane.xlu0 %410
        %v412 = vsel %vm299, %v386, 0.0
        %413 = vadd.xlane.f32.xlu0 %v412
        %v414 = vpop.xlane.xlu0 %413
        %v415 = vsel %vm299, %v387, 0.0
        %416 = vadd.xlane.f32.xlu0 %v415
        %v417 = vpop.xlane.xlu0 %416
        %v418 = vsel %vm299, %v388, 0.0
        %419 = vadd.xlane.f32.xlu0 %v418
        %v420 = vpop.xlane.xlu0 %419
        %v421 = vsel %vm299, %v389, 0.0
        %422 = vadd.xlane.f32.xlu0 %v421
        %v423 = vpop.xlane.xlu0 %422
        %v424 = vsel %vm299, %v390, 0.0
        %425 = vadd.xlane.f32.xlu0 %v424
        %v426 = vpop.xlane.xlu0 %425
        %v427 = vsel %vm299, %v391, 0.0
        %428 = vadd.xlane.f32.xlu0 %v427
        %v429 = vpop.xlane.xlu0 %428
        %v430 = vsel %vm299, %v392, 0.0
        %431 = vadd.xlane.f32.xlu0 %v430
        %v432 = vpop.xlane.xlu0 %431
        %v433 = vsel %vm299, %v393, 0.0
        %434 = vadd.xlane.f32.xlu0 %v433
        %v435 = vpop.xlane.xlu0 %434
        %v436 = vsel %vm299, %v394, 0.0
        %437 = vadd.xlane.f32.xlu0 %v436
        %v438 = vpop.xlane.xlu0 %437
        %v439 = vsel %vm299, %v395, 0.0
        %440 = vadd.xlane.f32.xlu0 %v439
        %v441 = vpop.xlane.xlu0 %440
        %v442 = vsel %vm299, %v396, 0.0
        %443 = vadd.xlane.f32.xlu0 %v442
        %v444 = vpop.xlane.xlu0 %443
        %v445 = vld [vmem:[%s1] sm:$0xff]
        %v446 = vld [vmem:[%s1 + $0x8] sm:$0xff]
        %v463 = vlaneseq
        %v464 = vand.u32 %v463, 127
        %v465 = vlaneseq
        %v466 = vshrl.u32 %v465, 7
        %v467 = vsub.s32 %v464, %v466
        %v468 = vrot.slane %v399, %v467
        %v469 = vlaneseq
        %v470 = vshrl.u32 %v469, 7
        %v471 = vsub.s32 %v464, %v470
        %v472 = vrot.slane %v402, %v471
        %v473 = vlaneseq
        %v474 = vshrl.u32 %v473, 7
        %v475 = vsub.s32 %v464, %v474
        %v476 = vrot.slane %v405, %v475
        %v477 = vlaneseq
        %v478 = vshrl.u32 %v477, 7
        %v479 = vsub.s32 %v464, %v478
        %v480 = vrot.slane %v408, %v479
        %v481 = vlaneseq
        %v482 = vshrl.u32 %v481, 7
        %v483 = vsub.s32 %v464, %v482
        %v484 = vrot.slane %v411, %v483
        %v485 = vlaneseq
        %v486 = vshrl.u32 %v485, 7
        %v487 = vsub.s32 %v464, %v486
        %v488 = vrot.slane %v414, %v487
        %v489 = vlaneseq
        %v490 = vshrl.u32 %v489, 7
        %v491 = vsub.s32 %v464, %v490
        %v492 = vrot.slane %v417, %v491
        %v493 = vlaneseq
        %v494 = vshrl.u32 %v493, 7
        %v495 = vsub.s32 %v464, %v494
        %v496 = vrot.slane %v420, %v495
        %v497 = vlaneseq
        %v498 = vshrl.u32 %v497, 7
        %v499 = vsub.s32 %v464, %v498
        %v500 = vrot.slane %v423, %v499
        %v501 = vlaneseq
        %v502 = vshrl.u32 %v501, 7
        %v503 = vsub.s32 %v464, %v502
        %v504 = vrot.slane %v426, %v503
        %v505 = vlaneseq
        %v506 = vshrl.u32 %v505, 7
        %v507 = vsub.s32 %v464, %v506
        %v508 = vrot.slane %v429, %v507
        %v509 = vlaneseq
        %v510 = vshrl.u32 %v509, 7
        %v511 = vsub.s32 %v464, %v510
        %v512 = vrot.slane %v432, %v511
        %v513 = vlaneseq
        %v514 = vshrl.u32 %v513, 7
        %v515 = vsub.s32 %v464, %v514
        %v516 = vrot.slane %v435, %v515
        %v517 = vlaneseq
        %v518 = vshrl.u32 %v517, 7
        %v519 = vsub.s32 %v464, %v518
        %v520 = vrot.slane %v438, %v519
        %v521 = vlaneseq
        %v522 = vshrl.u32 %v521, 7
        %v523 = vsub.s32 %v464, %v522
        %v524 = vrot.slane %v441, %v523
        %v525 = vlaneseq
        %v526 = vshrl.u32 %v525, 7
        %v527 = vsub.s32 %v464, %v526
        %v528 = vrot.slane %v444, %v527
        %vm529 = vcmask 1041409
        %v530 = vsel %vm529, %v472, %v468
        %vm531 = vcmask 1042434
        %v532 = vsel %vm531, %v476, %v530
        %vm533 = vcmask 1043459
        %v534 = vsel %vm533, %v480, %v532
        %vm535 = vcmask 1044484
        %v536 = vsel %vm535, %v484, %v534
        %vm537 = vcmask 1045509
        %v538 = vsel %vm537, %v488, %v536
        %vm539 = vcmask 1046534
        %v540 = vsel %vm539, %v492, %v538
        %vm541 = vcmask 1047559
        %v542 = vsel %vm541, %v496, %v540
        %v543 = vsel %vm529, %v504, %v500
        %v544 = vsel %vm531, %v508, %v543
        %v545 = vsel %vm533, %v512, %v544
        %v546 = vsel %vm535, %v516, %v545
        %v547 = vsel %vm537, %v520, %v546
        %v548 = vsel %vm539, %v524, %v547
        %v549 = vsel %vm541, %v528, %v548
        %vm550 = vcmask 64512
        %v551 = vsel %vm550, %v542, 0
        %v553 = vsel %vm550, %v549, 0
        %555 = vmatprep.subr.mxu0 0.0
        %556 = vmatpush1.msra.mxu0 %v446
        %557 = vmatprep.subr.mxu0 0.0
        %558 = vmatpush1.msra.mxu0 0.0
        %559 = vmatprep.subr.mxu0 0.0
        %560 = vmatpush1.msra.mxu0 0.0
        %561 = vmatprep.subr.mxu0 0.0
        %562 = vmatpush1.msra.mxu0 0.0
        %563 = vmatprep.subr.mxu0 0.0
        %564 = vmatpush1.msra.mxu0 0.0
        %565 = vmatprep.subr.mxu0 0.0
        %566 = vmatpush1.msra.mxu0 0.0
        %567 = vmatprep.subr.mxu0 0.0
        %568 = vmatpush1.msra.mxu0 0.0
        %569 = vmatprep.subr.mxu0 0.0
        %570 = vmatpush1.msra.mxu0 0.0
        %571 = vmatprep.subr.mxu0 0.0
        %572 = vmatpush1.msra.mxu0 0.0
        %573 = vmatprep.subr.mxu0 0.0
        %574 = vmatpush1.msra.mxu0 0.0
        %575 = vmatprep.subr.mxu0 0.0
        %576 = vmatpush1.msra.mxu0 0.0
        %577 = vmatprep.subr.mxu0 0.0
        %578 = vmatpush1.msra.mxu0 0.0
        %579 = vmatprep.subr.mxu0 0.0
        %580 = vmatpush1.msra.mxu0 0.0
        %581 = vmatprep.subr.mxu0 0.0
        %582 = vmatpush1.msra.mxu0 0.0
        %583 = vmatprep.subr.mxu0 0.0
        %584 = vmatpush1.msra.mxu0 0.0
        %585 = vmatprep.subr.mxu0 0.0
        %586 = vmatpush1.msra.mxu0 0.0
        %587 = vmatprep.subr.mxu0 0.0
        %588 = vmatpush1.msra.mxu0 0.0
        %589 = vmatprep.subr.mxu0 0.0
        %590 = vmatpush1.msra.mxu0 0.0
        %591 = vmatprep.subr.mxu0 0.0
        %592 = vmatpush1.msra.mxu0 0.0
        %593 = vmatprep.subr.mxu0 0.0
        %594 = vmatpush1.msra.mxu0 0.0
        %595 = vmatprep.subr.mxu0 0.0
        %596 = vmatpush1.msra.mxu0 0.0
        %597 = vmatprep.subr.mxu0 0.0
        %598 = vmatpush1.msra.mxu0 0.0
        %599 = vmatprep.subr.mxu0 0.0
        %600 = vmatpush1.msra.mxu0 0.0
        %601 = vmatprep.subr.mxu0 0.0
        %602 = vmatpush1.msra.mxu0 0.0
        %603 = vmatprep.subr.mxu0 0.0
        %604 = vmatpush1.msra.mxu0 0.0
        %605 = vmatprep.subr.mxu0 0.0
        %606 = vmatpush1.msra.mxu0 0.0
        %607 = vmatprep.subr.mxu0 0.0
        %608 = vmatpush1.msra.mxu0 0.0
        %609 = vmatprep.subr.mxu0 0.0
        %610 = vmatpush1.msra.mxu0 0.0
        %611 = vmatprep.subr.mxu0 0.0
        %612 = vmatpush1.msra.mxu0 0.0
        %613 = vmatprep.subr.mxu0 0.0
        %614 = vmatpush1.msra.mxu0 0.0
        %615 = vmatprep.subr.mxu0 0.0
        %616 = vmatpush1.msra.mxu0 0.0
        %617 = vmatprep.subr.mxu0 0.0
        %618 = vmatpush1.msra.mxu0 0.0
        %619 = vmatprep.mubr.f32.mxu0 0.0
        %620 = vmatmul.mubr.f32.gmra.mrb[0].mxu0 %v551
        %v621 = vpop.f32.mrb[0].mxu0
        %v622 = vadd.f32 0.0, %v621
        %v623 = vpop.f32.mrb[0].mxu0
        %624 = vmatprep.mubr.f32.mxu0 0.0
        %625 = vmatmul.mubr.f32.gmra.mrb[0].mxu0 %v553
        %v626 = vpop.f32.mrb[0].mxu0
        %v627 = vadd.f32 0.0, %v626
        %v628 = vpop.f32.mrb[0].mxu0
        %629 = vdwg.mxu0
        %v631 = vsel %vm550, %v373, 0
        %v634 = vsel %vm550, %v378, 0
        %636 = vmatprep.subr.mxu0 0.0
        %637 = vmatpush1.msra.mxu0 %v445
        %638 = vmatprep.subr.mxu0 0.0
        %639 = vmatpush1.msra.mxu0 0.0
        %640 = vmatprep.subr.mxu0 0.0
        %641 = vmatpush1.msra.mxu0 0.0
        %642 = vmatprep.subr.mxu0 0.0
        %643 = vmatpush1.msra.mxu0 0.0
        %644 = vmatprep.subr.mxu0 0.0
        %645 = vmatpush1.msra.mxu0 0.0
        %646 = vmatprep.subr.mxu0 0.0
        %647 = vmatpush1.msra.mxu0 0.0
        %648 = vmatprep.subr.mxu0 0.0
        %649 = vmatpush1.msra.mxu0 0.0
        %650 = vmatprep.subr.mxu0 0.0
        %651 = vmatpush1.msra.mxu0 0.0
        %652 = vmatprep.subr.mxu0 0.0
        %653 = vmatpush1.msra.mxu0 0.0
        %654 = vmatprep.subr.mxu0 0.0
        %655 = vmatpush1.msra.mxu0 0.0
        %656 = vmatprep.subr.mxu0 0.0
        %657 = vmatpush1.msra.mxu0 0.0
        %658 = vmatprep.subr.mxu0 0.0
        %659 = vmatpush1.msra.mxu0 0.0
        %660 = vmatprep.subr.mxu0 0.0
        %661 = vmatpush1.msra.mxu0 0.0
        %662 = vmatprep.subr.mxu0 0.0
        %663 = vmatpush1.msra.mxu0 0.0
        %664 = vmatprep.subr.mxu0 0.0
        %665 = vmatpush1.msra.mxu0 0.0
        %666 = vmatprep.subr.mxu0 0.0
        %667 = vmatpush1.msra.mxu0 0.0
        %668 = vmatprep.subr.mxu0 0.0
        %669 = vmatpush1.msra.mxu0 0.0
        %670 = vmatprep.subr.mxu0 0.0
        %671 = vmatpush1.msra.mxu0 0.0
        %672 = vmatprep.subr.mxu0 0.0
        %673 = vmatpush1.msra.mxu0 0.0
        %674 = vmatprep.subr.mxu0 0.0
        %675 = vmatpush1.msra.mxu0 0.0
        %676 = vmatprep.subr.mxu0 0.0
        %677 = vmatpush1.msra.mxu0 0.0
        %678 = vmatprep.subr.mxu0 0.0
        %679 = vmatpush1.msra.mxu0 0.0
        %680 = vmatprep.subr.mxu0 0.0
        %681 = vmatpush1.msra.mxu0 0.0
        %682 = vmatprep.subr.mxu0 0.0
        %683 = vmatpush1.msra.mxu0 0.0
        %684 = vmatprep.subr.mxu0 0.0
        %685 = vmatpush1.msra.mxu0 0.0
        %686 = vmatprep.subr.mxu0 0.0
        %687 = vmatpush1.msra.mxu0 0.0
        %688 = vmatprep.subr.mxu0 0.0
        %689 = vmatpush1.msra.mxu0 0.0
        %690 = vmatprep.subr.mxu0 0.0
        %691 = vmatpush1.msra.mxu0 0.0
        %692 = vmatprep.subr.mxu0 0.0
        %693 = vmatpush1.msra.mxu0 0.0
        %694 = vmatprep.subr.mxu0 0.0
        %695 = vmatpush1.msra.mxu0 0.0
        %696 = vmatprep.subr.mxu0 0.0
        %697 = vmatpush1.msra.mxu0 0.0
        %698 = vmatprep.subr.mxu0 0.0
        %699 = vmatpush1.msra.mxu0 0.0
        %700 = vmatprep.mubr.f32.mxu0 0.0
        %701 = vmatmul.mubr.f32.gmra.mrb[0].mxu0 %v631
        %v702 = vpop.f32.mrb[0].mxu0
        %v703 = vadd.f32 %v622, %v702
        %v704 = vpop.f32.mrb[0].mxu0
        %705 = vmatprep.mubr.f32.mxu0 0.0
        %706 = vmatmul.mubr.f32.gmra.mrb[0].mxu0 %v634
        %v707 = vpop.f32.mrb[0].mxu0
        %v708 = vadd.f32 %v627, %v707
        %v709 = vpop.f32.mrb[0].mxu0
        %710 = vdwg.mxu0
        %v711 = vld [vmem:[%s283] sm:$0xff]
        %v712 = vld [vmem:[%s283 + $0x8] sm:$0xff]
        %714 = vset.pattern.permute.xlu0 0
        %715 = vperm.xlu0 %714, %v711
        %v716 = vpop.permute.xlu0 %715
        %719 = vset.pattern.permute.xlu0 0
        %720 = vperm.xlu0 %719, %v712
        %v721 = vpop.permute.xlu0 %720
        %v723 = vmul.f32 %v703, %v716
        %v724 = vmul.f32 %v708, %v721
        %vm725 = vcmp.gt.f32.partialorder %v723, 0.0
        %vm726 = vcmp.gt.f32.partialorder %v724, 0.0
        %v727 = vmin.f32 %v723, 0.0
        %v728 = vmin.f32 %v724, 0.0
        %v729 = vmul.f32 %v727, 1.442695
        %v730 = vpow.pop %v729
        %v731 = vmul.f32 %v728, 1.442695
        %v732 = vpow.pop %v731
        %v733 = vsub.f32 %v730, 1.0
        %v734 = vsub.f32 %v732, 1.0
        %v735 = vsel %vm725, %v723, %v733
        %v736 = vsel %vm726, %v724, %v734
        %vm737 = vcmask 130048
        %738 = vst.msk [vmem:[%s289] sm:$0xff] %vm737, %v735
        %739 = vst.msk [vmem:[%s289 + $0x8] sm:$0xff] %vm737, %v736
        %s740 = smul.u32 2, %s19
        %p741 = scmp.lt.s32.totalorder %s740, 3
        %s742 = scalar_select %p741, %s740, 3
        %s743 = smul.addr %s742, 8
        %s744 = scalar_lea.vmem %s5, %s743
        // Predicated region
        $region45: #{tpu_custom_call.1} parent=39 // pred_check
          %p745 = pneg %p157
        $region46: #{tpu_custom_call.1} parent=39 // pred_check_branch
          %747 = sbr.rel (%p745) target = $region48
        $region47: #{tpu_custom_call.1} parent=39 // pred_region
          %s748 = smul.u32 2, %s19
        $region48: #{tpu_custom_call.1} parent=39 // pred_fallthru
          _
      $region40: #{tpu_custom_call.1} parent=5 // pred_fallthru
        _
      %p749 = scmp.le.s32.totalorder 2, %s14
      // Predicated region
      $region49: #{tpu_custom_call.1} parent=5 // pred_check
        %p750 = pneg %p749
      $region50: #{tpu_custom_call.1} parent=5 // pred_check_branch
        %752 = sbr.rel (%p750) target = $region52
      $region51: #{tpu_custom_call.1} parent=5 // pred_region
        %s753 = ssub.s32 %s14, 2
        // Predicated region
        $region53: #{tpu_custom_call.1} parent=51 // pred_check
          %p754 = pneg %p163
        $region54: #{tpu_custom_call.1} parent=51 // pred_check_branch
          %756 = sbr.rel (%p754) target = $region56
        $region55: #{tpu_custom_call.1} parent=51 // pred_region
          %s757 = smul.u32 2, %s20
          %p758 = scmp.lt.s32.totalorder %s757, 3
          %s759 = scalar_select %p758, %s757, 3
          %s760 = smul.addr %s759, 8
          %s761 = scalar_lea.vmem %s5, %s760
        $region56: #{tpu_custom_call.1} parent=51 // pred_fallthru
          _
      $region52: #{tpu_custom_call.1} parent=5 // pred_fallthru
        _
    $region6: #{tpu_custom_call.1} parent=1 // loop_footer
      %s18 = sadd.s32 1, %s14
    $region7: #{tpu_custom_call.1} parent=1 // loop_footer_branch
      %13 = sbr.rel target = $region3
    $region8: #{tpu_custom_call.1} parent=1 // loop_exit
      _
    %762 = vsyncpa [#allocation3], 1
    %s763 = scalar_lea.sflag [#allocation3], 1
    %764 = vsyncpa %s763, 1

</llo_original>
